<compile_context>
chip_gen: v7x
topology: tpu7x:2x2x1
jax: 0.10.0
libtpu: 0.0.40
codegen_flags: <defaults>
</compile_context>

<pallas_src>
import functools

import jax
import jax.numpy as jnp
from jax.experimental import pallas as pl
from jax.experimental.pallas import tpu as pltpu

LN_EPS = 1e-5  # PyTorch nn.LayerNorm default


def _round_up(x, m):
    return (x + m - 1) // m * m


def _layer_norm(h, gamma, beta):
    mu = jnp.mean(h, axis=-1, keepdims=True)
    var = jnp.mean((h - mu) * (h - mu), axis=-1, keepdims=True)
    return (h - mu) * jax.lax.rsqrt(var + LN_EPS) * gamma + beta


def policy_kernel(x_ref,
                  w1_ref, b1_ref, g1_ref, be1_ref,
                  w2_ref, b2_ref, g2_ref, be2_ref,
                  w3_ref, b3_ref,
                  o_ref, *, max_action):
    # Matmul inputs in bf16 (native MXU path), f32 accumulation.
    # Elementwise math (LayerNorm / ReLU / tanh) stays in f32.
    x = x_ref[...].astype(jnp.bfloat16)

    # Linear(state_dim, 400) -> LayerNorm(400) -> ReLU
    h1 = jnp.dot(x, w1_ref[...], preferred_element_type=jnp.float32) + b1_ref[...]
    h1 = _layer_norm(h1, g1_ref[...], be1_ref[...])
    h1 = jnp.maximum(h1, 0.0)

    # Linear(400, 300) -> LayerNorm(300) -> ReLU
    h2 = jnp.dot(h1.astype(jnp.bfloat16), w2_ref[...],
                 preferred_element_type=jnp.float32) + b2_ref[...]
    h2 = _layer_norm(h2, g2_ref[...], be2_ref[...])
    h2 = jnp.maximum(h2, 0.0)

    # Linear(300, action_dim_padded) -> max_action * tanh
    a = jnp.dot(h2.astype(jnp.bfloat16), w3_ref[...],
                preferred_element_type=jnp.float32) + b3_ref[...]
    o_ref[...] = (max_action * jnp.tanh(a)).astype(o_ref.dtype)


def policy_forward(state, params, max_action, *, batch_tile=256):
    """state: (B, state_dim) float32.  Returns (B, action_dim) float32."""
    (w1, b1, g1, be1, w2, b2, g2, be2, w3, b3) = params
    B, S = state.shape
    A = w3.shape[1]

    # bf16 weights: half the HBM weight traffic, native MXU input dtype.
    w1 = w1.astype(jnp.bfloat16)
    w2 = w2.astype(jnp.bfloat16)
    w3 = w3.astype(jnp.bfloat16)

    # Pad the output lane dim to 128 so the final store is unmasked/lane-dense.
    A_pad = _round_up(A, 128)
    if A_pad != A:
        w3 = jnp.pad(w3, ((0, 0), (0, A_pad - A)))
        b3 = jnp.pad(b3, ((0, 0), (0, A_pad - A)))

    # Batch tiling: TB <= 256 fits comfortably in scoped VMEM on v5e/v6e/v7x
    # (weights ~0.33 MB bf16 + a few hundred KB of activations per tile).
    TB = min(batch_tile, _round_up(B, 8))
    B_pad = _round_up(B, TB)
    if B_pad != B:
        state = jnp.pad(state, ((0, B_pad - B), (0, 0)))

    const2 = lambda i: (0, 0)  # weights / LN params stay VMEM-resident
    kernel = functools.partial(policy_kernel, max_action=max_action)

    out = pl.pallas_call(
        kernel,
        out_shape=jax.ShapeDtypeStruct((B_pad, A_pad), jnp.float32),
        grid=(B_pad // TB,),
        in_specs=[
            pl.BlockSpec((TB, S), lambda i: (i, 0)),          # state tile
            pl.BlockSpec(w1.shape, const2), pl.BlockSpec(b1.shape, const2),
            pl.BlockSpec(g1.shape, const2), pl.BlockSpec(be1.shape, const2),
            pl.BlockSpec(w2.shape, const2), pl.BlockSpec(b2.shape, const2),
            pl.BlockSpec(g2.shape, const2), pl.BlockSpec(be2.shape, const2),
            pl.BlockSpec(w3.shape, const2), pl.BlockSpec(b3.shape, const2),
        ],
        out_specs=pl.BlockSpec((TB, A_pad), lambda i: (i, 0)),
        compiler_params=pltpu.CompilerParams(
            dimension_semantics=("parallel",)),  # megacore batch split on v7x
    )(state, w1, b1, g1, be1, w2, b2, g2, be2, w3, b3)

    return out[:B, :A]


def init_params(key, state_dim, action_dim):
    """Deterministic synthetic parameters (shapes follow the PyTorch module)."""
    ks = jax.random.split(key, 6)

    def linear(kw, kb, fan_in, fan_out):
        # Kaiming-ish scaled normal init; weights stored as (in, out).
        w = jax.random.normal(kw, (fan_in, fan_out), jnp.float32) * (1.0 / jnp.sqrt(fan_in))
        b = jax.random.normal(kb, (1, fan_out), jnp.float32) * 0.01
        return w, b

    w1, b1 = linear(ks[0], ks[1], state_dim, 400)
    w2, b2 = linear(ks[2], ks[3], 400, 300)
    w3, b3 = linear(ks[4], ks[5], 300, action_dim)

    # LayerNorm affine params (PyTorch init: gamma=1, beta=0).
    g1, be1 = jnp.ones((1, 400), jnp.float32), jnp.zeros((1, 400), jnp.float32)
    g2, be2 = jnp.ones((1, 300), jnp.float32), jnp.zeros((1, 300), jnp.float32)

    return (w1, b1, g1, be1, w2, b2, g2, be2, w3, b3)


def policy_ref(state, params, max_action):
    """Pure-JAX reference with the same bf16 matmul quantization as the kernel."""
    (w1, b1, g1, be1, w2, b2, g2, be2, w3, b3) = params
    bf = jnp.bfloat16
    h = jnp.dot(state.astype(bf), w1.astype(bf),
                preferred_element_type=jnp.float32) + b1
    h = _layer_norm(h, g1, be1)
    h = jnp.maximum(h, 0.0)
    h = jnp.dot(h.astype(bf), w2.astype(bf),
                preferred_element_type=jnp.float32) + b2
    h = _layer_norm(h, g2, be2)
    h = jnp.maximum(h, 0.0)
    a = jnp.dot(h.astype(bf), w3.astype(bf),
                preferred_element_type=jnp.float32) + b3
    return max_action * jnp.tanh(a)


if __name__ == "__main__":
    key = jax.random.PRNGKey(0)
    k_state, k_params = jax.random.split(key)

    batch = 2
    state_dim = 16
    action_dim = 8
    max_action = 1.0

    state = jax.random.normal(k_state, (batch, state_dim), jnp.float32)
    params = init_params(k_params, state_dim, action_dim)

    out = policy_forward(state, params, max_action)
    out = jax.block_until_ready(out)

    ref = policy_ref(state, params, max_action)
    assert out.shape == (batch, action_dim)
    assert jnp.allclose(out, ref, atol=1e-3, rtol=1e-3), "mismatch vs reference"

    print("KERNEL_OK")
</pallas_src>

<mosaic_0001>
module attributes {stable_mosaic.version = 11 : i64} {
  func.func @policy_kernel(%arg0: i32, %arg1: memref<8x16xf32, #tpu.memory_space<vmem>>, %arg2: memref<16x400xbf16, #tpu.memory_space<vmem>>, %arg3: memref<1x400xf32, #tpu.memory_space<vmem>>, %arg4: memref<1x400xf32, #tpu.memory_space<vmem>>, %arg5: memref<1x400xf32, #tpu.memory_space<vmem>>, %arg6: memref<400x300xbf16, #tpu.memory_space<vmem>>, %arg7: memref<1x300xf32, #tpu.memory_space<vmem>>, %arg8: memref<1x300xf32, #tpu.memory_space<vmem>>, %arg9: memref<1x300xf32, #tpu.memory_space<vmem>>, %arg10: memref<300x128xbf16, #tpu.memory_space<vmem>>, %arg11: memref<1x128xf32, #tpu.memory_space<vmem>>, %arg12: memref<8x128xf32, #tpu.memory_space<vmem>>) attributes {dimension_semantics = [#tpu.dimension_semantics<parallel>], iteration_bounds = array<i64: 1>, scalar_prefetch = 0 : i64, scratch_operands = 0 : i64, tpu.core_type = #tpu.core_type<tc>, window_params = [{transform_indices = @transform_0, window_bounds = array<i64: 8, 16>}, {pipeline_mode = #tpu.pipeline_mode<synchronous>, transform_indices = @transform_1, window_bounds = array<i64: 16, 400>}, {pipeline_mode = #tpu.pipeline_mode<synchronous>, transform_indices = @transform_2, window_bounds = array<i64: 1, 400>}, {pipeline_mode = #tpu.pipeline_mode<synchronous>, transform_indices = @transform_3, window_bounds = array<i64: 1, 400>}, {pipeline_mode = #tpu.pipeline_mode<synchronous>, transform_indices = @transform_4, window_bounds = array<i64: 1, 400>}, {pipeline_mode = #tpu.pipeline_mode<synchronous>, transform_indices = @transform_5, window_bounds = array<i64: 400, 300>}, {pipeline_mode = #tpu.pipeline_mode<synchronous>, transform_indices = @transform_6, window_bounds = array<i64: 1, 300>}, {pipeline_mode = #tpu.pipeline_mode<synchronous>, transform_indices = @transform_7, window_bounds = array<i64: 1, 300>}, {pipeline_mode = #tpu.pipeline_mode<synchronous>, transform_indices = @transform_8, window_bounds = array<i64: 1, 300>}, {pipeline_mode = #tpu.pipeline_mode<synchronous>, transform_indices = @transform_9, window_bounds = array<i64: 300, 128>}, {pipeline_mode = #tpu.pipeline_mode<synchronous>, transform_indices = @transform_10, window_bounds = array<i64: 1, 128>}, {transform_indices = @transform_11, window_bounds = array<i64: 8, 128>}]} {
    %c0 = arith.constant 0 : index
    %c0_0 = arith.constant 0 : index
    %0 = vector.load %arg1[%c0, %c0_0] : memref<8x16xf32, #tpu.memory_space<vmem>>, vector<8x16xf32>
    %1 = arith.truncf %0 : vector<8x16xf32> to vector<8x16xbf16>
    %c0_1 = arith.constant 0 : index
    %c0_2 = arith.constant 0 : index
    %2 = vector.load %arg2[%c0_1, %c0_2] : memref<16x400xbf16, #tpu.memory_space<vmem>>, vector<16x400xbf16>
    %cst = arith.constant dense<0.000000e+00> : vector<8x400xf32>
    %3 = tpu.matmul %1, %2, %cst {dimension_numbers = #tpu.dot_dimension_numbers<[1], [0], [0], [1], [0, 0, 1, 1], [], []>} : vector<8x16xbf16>, vector<16x400xbf16>, vector<8x400xf32> -> vector<8x400xf32>
    %c0_3 = arith.constant 0 : index
    %c0_4 = arith.constant 0 : index
    %4 = vector.load %arg3[%c0_3, %c0_4] : memref<1x400xf32, #tpu.memory_space<vmem>>, vector<1x400xf32>
    %5 = vector.broadcast %4 : vector<1x400xf32> to vector<8x400xf32>
    %6 = arith.addf %3, %5 : vector<8x400xf32>
    %c0_5 = arith.constant 0 : index
    %c0_6 = arith.constant 0 : index
    %7 = vector.load %arg4[%c0_5, %c0_6] : memref<1x400xf32, #tpu.memory_space<vmem>>, vector<1x400xf32>
    %c0_7 = arith.constant 0 : index
    %c0_8 = arith.constant 0 : index
    %8 = vector.load %arg5[%c0_7, %c0_8] : memref<1x400xf32, #tpu.memory_space<vmem>>, vector<1x400xf32>
    %cst_9 = arith.constant dense<0.000000e+00> : vector<8xf32>
    %9 = vector.multi_reduction <add>, %6, %cst_9 [1] : vector<8x400xf32> to vector<8xf32>
    %10 = vector.shape_cast %9 : vector<8xf32> to vector<8x1xf32>
    %cst_10 = arith.constant 4.000000e+02 : f32
    %11 = vector.broadcast %cst_10 : f32 to vector<8x1xf32>
    %12 = arith.divf %10, %11 : vector<8x1xf32>
    %13 = vector.broadcast %12 : vector<8x1xf32> to vector<8x400xf32>
    %14 = arith.subf %6, %13 : vector<8x400xf32>
    %15 = vector.broadcast %12 : vector<8x1xf32> to vector<8x400xf32>
    %16 = arith.subf %6, %15 : vector<8x400xf32>
    %17 = arith.mulf %14, %16 : vector<8x400xf32>
    %cst_11 = arith.constant dense<0.000000e+00> : vector<8xf32>
    %18 = vector.multi_reduction <add>, %17, %cst_11 [1] : vector<8x400xf32> to vector<8xf32>
    %19 = vector.shape_cast %18 : vector<8xf32> to vector<8x1xf32>
    %cst_12 = arith.constant 4.000000e+02 : f32
    %20 = vector.broadcast %cst_12 : f32 to vector<8x1xf32>
    %21 = arith.divf %19, %20 : vector<8x1xf32>
    %22 = vector.broadcast %12 : vector<8x1xf32> to vector<8x400xf32>
    %23 = arith.subf %6, %22 : vector<8x400xf32>
    %cst_13 = arith.constant 9.99999974E-6 : f32
    %24 = vector.broadcast %cst_13 : f32 to vector<8x1xf32>
    %25 = arith.addf %21, %24 : vector<8x1xf32>
    %26 = math.rsqrt %25 : vector<8x1xf32>
    %27 = vector.broadcast %26 : vector<8x1xf32> to vector<8x400xf32>
    %28 = arith.mulf %23, %27 : vector<8x400xf32>
    %29 = vector.broadcast %7 : vector<1x400xf32> to vector<8x400xf32>
    %30 = arith.mulf %28, %29 : vector<8x400xf32>
    %31 = vector.broadcast %8 : vector<1x400xf32> to vector<8x400xf32>
    %32 = arith.addf %30, %31 : vector<8x400xf32>
    %cst_14 = arith.constant 0.000000e+00 : f32
    %33 = vector.broadcast %cst_14 : f32 to vector<8x400xf32>
    %34 = arith.maximumf %32, %33 : vector<8x400xf32>
    %35 = arith.truncf %34 : vector<8x400xf32> to vector<8x400xbf16>
    %c0_15 = arith.constant 0 : index
    %c0_16 = arith.constant 0 : index
    %36 = vector.load %arg6[%c0_15, %c0_16] : memref<400x300xbf16, #tpu.memory_space<vmem>>, vector<400x300xbf16>
    %cst_17 = arith.constant dense<0.000000e+00> : vector<8x300xf32>
    %37 = tpu.matmul %35, %36, %cst_17 {dimension_numbers = #tpu.dot_dimension_numbers<[1], [0], [0], [1], [0, 0, 1, 1], [], []>} : vector<8x400xbf16>, vector<400x300xbf16>, vector<8x300xf32> -> vector<8x300xf32>
    %c0_18 = arith.constant 0 : index
    %c0_19 = arith.constant 0 : index
    %38 = vector.load %arg7[%c0_18, %c0_19] : memref<1x300xf32, #tpu.memory_space<vmem>>, vector<1x300xf32>
    %39 = vector.broadcast %38 : vector<1x300xf32> to vector<8x300xf32>
    %40 = arith.addf %37, %39 : vector<8x300xf32>
    %c0_20 = arith.constant 0 : index
    %c0_21 = arith.constant 0 : index
    %41 = vector.load %arg8[%c0_20, %c0_21] : memref<1x300xf32, #tpu.memory_space<vmem>>, vector<1x300xf32>
    %c0_22 = arith.constant 0 : index
    %c0_23 = arith.constant 0 : index
    %42 = vector.load %arg9[%c0_22, %c0_23] : memref<1x300xf32, #tpu.memory_space<vmem>>, vector<1x300xf32>
    %cst_24 = arith.constant dense<0.000000e+00> : vector<8xf32>
    %43 = vector.multi_reduction <add>, %40, %cst_24 [1] : vector<8x300xf32> to vector<8xf32>
    %44 = vector.shape_cast %43 : vector<8xf32> to vector<8x1xf32>
    %cst_25 = arith.constant 3.000000e+02 : f32
    %45 = vector.broadcast %cst_25 : f32 to vector<8x1xf32>
    %46 = arith.divf %44, %45 : vector<8x1xf32>
    %47 = vector.broadcast %46 : vector<8x1xf32> to vector<8x300xf32>
    %48 = arith.subf %40, %47 : vector<8x300xf32>
    %49 = vector.broadcast %46 : vector<8x1xf32> to vector<8x300xf32>
    %50 = arith.subf %40, %49 : vector<8x300xf32>
    %51 = arith.mulf %48, %50 : vector<8x300xf32>
    %cst_26 = arith.constant dense<0.000000e+00> : vector<8xf32>
    %52 = vector.multi_reduction <add>, %51, %cst_26 [1] : vector<8x300xf32> to vector<8xf32>
    %53 = vector.shape_cast %52 : vector<8xf32> to vector<8x1xf32>
    %cst_27 = arith.constant 3.000000e+02 : f32
    %54 = vector.broadcast %cst_27 : f32 to vector<8x1xf32>
    %55 = arith.divf %53, %54 : vector<8x1xf32>
    %56 = vector.broadcast %46 : vector<8x1xf32> to vector<8x300xf32>
    %57 = arith.subf %40, %56 : vector<8x300xf32>
    %cst_28 = arith.constant 9.99999974E-6 : f32
    %58 = vector.broadcast %cst_28 : f32 to vector<8x1xf32>
    %59 = arith.addf %55, %58 : vector<8x1xf32>
    %60 = math.rsqrt %59 : vector<8x1xf32>
    %61 = vector.broadcast %60 : vector<8x1xf32> to vector<8x300xf32>
    %62 = arith.mulf %57, %61 : vector<8x300xf32>
    %63 = vector.broadcast %41 : vector<1x300xf32> to vector<8x300xf32>
    %64 = arith.mulf %62, %63 : vector<8x300xf32>
    %65 = vector.broadcast %42 : vector<1x300xf32> to vector<8x300xf32>
    %66 = arith.addf %64, %65 : vector<8x300xf32>
    %cst_29 = arith.constant 0.000000e+00 : f32
    %67 = vector.broadcast %cst_29 : f32 to vector<8x300xf32>
    %68 = arith.maximumf %66, %67 : vector<8x300xf32>
    %69 = arith.truncf %68 : vector<8x300xf32> to vector<8x300xbf16>
    %c0_30 = arith.constant 0 : index
    %c0_31 = arith.constant 0 : index
    %70 = vector.load %arg10[%c0_30, %c0_31] : memref<300x128xbf16, #tpu.memory_space<vmem>>, vector<300x128xbf16>
    %cst_32 = arith.constant dense<0.000000e+00> : vector<8x128xf32>
    %71 = tpu.matmul %69, %70, %cst_32 {dimension_numbers = #tpu.dot_dimension_numbers<[1], [0], [0], [1], [0, 0, 1, 1], [], []>} : vector<8x300xbf16>, vector<300x128xbf16>, vector<8x128xf32> -> vector<8x128xf32>
    %c0_33 = arith.constant 0 : index
    %c0_34 = arith.constant 0 : index
    %72 = vector.load %arg11[%c0_33, %c0_34] : memref<1x128xf32, #tpu.memory_space<vmem>>, vector<1x128xf32>
    %73 = vector.broadcast %72 : vector<1x128xf32> to vector<8x128xf32>
    %74 = arith.addf %71, %73 : vector<8x128xf32>
    %75 = math.tanh %74 : vector<8x128xf32>
    %cst_35 = arith.constant 1.000000e+00 : f32
    %76 = vector.broadcast %cst_35 : f32 to vector<8x128xf32>
    %77 = arith.mulf %76, %75 : vector<8x128xf32>
    %c0_36 = arith.constant 0 : index
    %c0_37 = arith.constant 0 : index
    %78 = vector.load %arg12[%c0_36, %c0_37] : memref<8x128xf32, #tpu.memory_space<vmem>>, vector<8x128xf32>
    tpu.vector_store %arg12[%c0_36, %c0_37], %77 {strides = array<i32>} : memref<8x128xf32, #tpu.memory_space<vmem>>, vector<8x128xf32>,
    return
  }
  func.func @transform_0(%arg0: i32) -> (i32, i32) {
    %c0_i32 = arith.constant 0 : i32
    %c0_i32_0 = arith.constant 0 : i32
    return %arg0, %c0_i32 : i32, i32
  }
  func.func @transform_1(%arg0: i32) -> (i32, i32) {
    %c0_i32 = arith.constant 0 : i32
    %c0_i32_0 = arith.constant 0 : i32
    %c0_i32_1 = arith.constant 0 : i32
    return %c0_i32, %c0_i32_0 : i32, i32
  }
  func.func @transform_2(%arg0: i32) -> (i32, i32) {
    %c0_i32 = arith.constant 0 : i32
    %c0_i32_0 = arith.constant 0 : i32
    %c0_i32_1 = arith.constant 0 : i32
    return %c0_i32, %c0_i32_0 : i32, i32
  }
  func.func @transform_3(%arg0: i32) -> (i32, i32) {
    %c0_i32 = arith.constant 0 : i32
    %c0_i32_0 = arith.constant 0 : i32
    %c0_i32_1 = arith.constant 0 : i32
    return %c0_i32, %c0_i32_0 : i32, i32
  }
  func.func @transform_4(%arg0: i32) -> (i32, i32) {
    %c0_i32 = arith.constant 0 : i32
    %c0_i32_0 = arith.constant 0 : i32
    %c0_i32_1 = arith.constant 0 : i32
    return %c0_i32, %c0_i32_0 : i32, i32
  }
  func.func @transform_5(%arg0: i32) -> (i32, i32) {
    %c0_i32 = arith.constant 0 : i32
    %c0_i32_0 = arith.constant 0 : i32
    %c0_i32_1 = arith.constant 0 : i32
    return %c0_i32, %c0_i32_0 : i32, i32
  }
  func.func @transform_6(%arg0: i32) -> (i32, i32) {
    %c0_i32 = arith.constant 0 : i32
    %c0_i32_0 = arith.constant 0 : i32
    %c0_i32_1 = arith.constant 0 : i32
    return %c0_i32, %c0_i32_0 : i32, i32
  }
  func.func @transform_7(%arg0: i32) -> (i32, i32) {
    %c0_i32 = arith.constant 0 : i32
    %c0_i32_0 = arith.constant 0 : i32
    %c0_i32_1 = arith.constant 0 : i32
    return %c0_i32, %c0_i32_0 : i32, i32
  }
  func.func @transform_8(%arg0: i32) -> (i32, i32) {
    %c0_i32 = arith.constant 0 : i32
    %c0_i32_0 = arith.constant 0 : i32
    %c0_i32_1 = arith.constant 0 : i32
    return %c0_i32, %c0_i32_0 : i32, i32
  }
  func.func @transform_9(%arg0: i32) -> (i32, i32) {
    %c0_i32 = arith.constant 0 : i32
    %c0_i32_0 = arith.constant 0 : i32
    %c0_i32_1 = arith.constant 0 : i32
    return %c0_i32, %c0_i32_0 : i32, i32
  }
  func.func @transform_10(%arg0: i32) -> (i32, i32) {
    %c0_i32 = arith.constant 0 : i32
    %c0_i32_0 = arith.constant 0 : i32
    %c0_i32_1 = arith.constant 0 : i32
    return %c0_i32, %c0_i32_0 : i32, i32
  }
  func.func @transform_11(%arg0: i32) -> (i32, i32) {
    %c0_i32 = arith.constant 0 : i32
    %c0_i32_0 = arith.constant 0 : i32
    return %arg0, %c0_i32 : i32, i32
  }
}

</mosaic_0001>

<llo_original>
// kernel: tpu_custom_call.1
$region0: #{tpu_custom_call.1}
  #allocation0 [shape = 'u32[]', space=smem, size = 0x4, offset = 0x4, fixed_abs, tag = 'smem constant byte address 0x4 - core index']
  #allocation1 [shape = 'u32[144,128]{1,0:T(1,128)}', space=vmem, size = 0x12000, scoped, tag = 'internal scratch']
  %s0 = inlined_call_operand.hbm [shape: f32[8,16], index: 0, kind: input, shape index: {}]
  %s1 = inlined_call_operand.hbm [shape: bf16[16,400], index: 1, kind: input, shape index: {}]
  %s2 = inlined_call_operand.vmem [shape: f32[1,400], index: 2, kind: input, shape index: {}]
  %s3 = inlined_call_operand.vmem [shape: f32[1,400], index: 3, kind: input, shape index: {}]
  %s4 = inlined_call_operand.vmem [shape: f32[1,400], index: 4, kind: input, shape index: {}]
  %s5 = inlined_call_operand.hbm [shape: bf16[400,300], index: 5, kind: input, shape index: {}]
  %s6 = inlined_call_operand.vmem [shape: f32[1,300], index: 6, kind: input, shape index: {}]
  %s7 = inlined_call_operand.vmem [shape: f32[1,300], index: 7, kind: input, shape index: {}]
  %s8 = inlined_call_operand.vmem [shape: f32[1,300], index: 8, kind: input, shape index: {}]
  %s9 = inlined_call_operand.hbm [shape: bf16[300,128], index: 9, kind: input, shape index: {}]
  %s10 = inlined_call_operand.vmem [shape: f32[1,128], index: 10, kind: input, shape index: {}]
  %s11 = inlined_call_operand.hbm [shape: f32[8,128], index: 11, kind: output, shape index: {}]
  %s12 = sld [smem:[#allocation0]]
  $region70: #{tpu_custom_call.1} parent=0
    _
  %s14 = ssub.s32 1, %s12
  %s15 = scalar_select 0, %s14, %s12
  $region1: #{tpu_custom_call.1} parent=0
    #allocation2 [shape = 'u8[4096]{0}', space=vmem, size = 0x1000, scoped, tag = 'input window, operand 0, single buffered']
    #allocation3 [shape = 's32[1]{0}', space=sflag, size = 0x4, scoped, tag = 'scoped memory for tpu_custom_call.1']
    #allocation4 [shape = 's32[1]{0}', space=sflag, size = 0x4, scoped, tag = 'scoped memory for tpu_custom_call.1']
    #allocation5 [shape = 'u8[16384]{0}', space=vmem, size = 0x4000, scoped, tag = 'input window, operand 1, single buffered']
    #allocation6 [shape = 's32[1]{0}', space=sflag, size = 0x4, scoped, tag = 'scoped memory for tpu_custom_call.1']
    #allocation7 [shape = 'u8[307200]{0}', space=vmem, size = 0x4b000, scoped, tag = 'input window, operand 5, single buffered']
    #allocation8 [shape = 'u8[77824]{0}', space=vmem, size = 0x13000, scoped, tag = 'input window, operand 9, single buffered']
    #allocation9 [shape = 's32[1]{0}', space=sflag, size = 0x4, scoped, tag = 'scoped memory for tpu_custom_call.1']
    #allocation10 [shape = 'u8[4096]{0}', space=vmem, size = 0x1000, scoped, tag = 'output window, operand 0, single buffered']
    %16 = vsyncpa [#allocation3], 0
    %17 = vsyncpa [#allocation6], 0
    %18 = vsyncpa [#allocation9], 0
    %19 = vsyncpa [#allocation4], 0
    // Predicated region
    $region2: #{tpu_custom_call.1} parent=1 // pred_check
      _
    $region3: #{tpu_custom_call.1} parent=1 // pred_check_branch
      %21 = sbr.rel (0) target = $region5
    $region4: #{tpu_custom_call.1} parent=1 // pred_region
      %s23 = ssub.s32 128, 128
      %24 = vsyncadd [#allocation3], %s23
      %s26 = sshll.u32 [#allocation2], 4
      %s27 = int_to_ptr.vmem [resolvable:$true] %s26
      %29 = dma.hbm_to_vmem [thread:$0]  %s0, 128, %s27, [#allocation3]
    $region5: #{tpu_custom_call.1} parent=1 // pred_fallthru
      _
    // Predicated region
    $region6: #{tpu_custom_call.1} parent=1 // pred_check
      _
    $region7: #{tpu_custom_call.1} parent=1 // pred_check_branch
      %31 = sbr.rel (0) target = $region9
    $region8: #{tpu_custom_call.1} parent=1 // pred_region
      %s33 = ssub.s32 512, 512
      %34 = vsyncadd [#allocation6], %s33
      %s35 = sshll.u32 [#allocation5], 4
      %s36 = int_to_ptr.vmem [resolvable:$true] %s35
      %41 = dma.hbm_to_vmem [thread:$0]  %s1, 512, %s36, [#allocation6], 256, 256, 16
    $region9: #{tpu_custom_call.1} parent=1 // pred_fallthru
      _
    // Predicated region
    $region10: #{tpu_custom_call.1} parent=1 // pred_check
      _
    $region11: #{tpu_custom_call.1} parent=1 // pred_check_branch
      %43 = sbr.rel (0) target = $region13
    $region12: #{tpu_custom_call.1} parent=1 // pred_region
      _
    $region13: #{tpu_custom_call.1} parent=1 // pred_fallthru
      _
    // Predicated region
    $region14: #{tpu_custom_call.1} parent=1 // pred_check
      _
    $region15: #{tpu_custom_call.1} parent=1 // pred_check_branch
      %45 = sbr.rel (0) target = $region17
    $region16: #{tpu_custom_call.1} parent=1 // pred_region
      _
    $region17: #{tpu_custom_call.1} parent=1 // pred_fallthru
      _
    // Predicated region
    $region18: #{tpu_custom_call.1} parent=1 // pred_check
      _
    $region19: #{tpu_custom_call.1} parent=1 // pred_check_branch
      %47 = sbr.rel (0) target = $region21
    $region20: #{tpu_custom_call.1} parent=1 // pred_region
      _
    $region21: #{tpu_custom_call.1} parent=1 // pred_fallthru
      _
    // Predicated region
    $region22: #{tpu_custom_call.1} parent=1 // pred_check
      _
    $region23: #{tpu_custom_call.1} parent=1 // pred_check_branch
      %49 = sbr.rel (0) target = $region25
    $region24: #{tpu_custom_call.1} parent=1 // pred_region
      %s51 = ssub.s32 9600, 9600
      %52 = vsyncadd [#allocation6], %s51
      %s53 = sshll.u32 [#allocation7], 4
      %s54 = int_to_ptr.vmem [resolvable:$true] %s53
      %59 = dma.hbm_to_vmem [thread:$0]  %s5, 9600, %s54, [#allocation6], 192, 192, 12
    $region25: #{tpu_custom_call.1} parent=1 // pred_fallthru
      _
    // Predicated region
    $region26: #{tpu_custom_call.1} parent=1 // pred_check
      _
    $region27: #{tpu_custom_call.1} parent=1 // pred_check_branch
      %61 = sbr.rel (0) target = $region29
    $region28: #{tpu_custom_call.1} parent=1 // pred_region
      _
    $region29: #{tpu_custom_call.1} parent=1 // pred_fallthru
      _
    // Predicated region
    $region30: #{tpu_custom_call.1} parent=1 // pred_check
      _
    $region31: #{tpu_custom_call.1} parent=1 // pred_check_branch
      %63 = sbr.rel (0) target = $region33
    $region32: #{tpu_custom_call.1} parent=1 // pred_region
      _
    $region33: #{tpu_custom_call.1} parent=1 // pred_fallthru
      _
    // Predicated region
    $region34: #{tpu_custom_call.1} parent=1 // pred_check
      _
    $region35: #{tpu_custom_call.1} parent=1 // pred_check_branch
      %65 = sbr.rel (0) target = $region37
    $region36: #{tpu_custom_call.1} parent=1 // pred_region
      _
    $region37: #{tpu_custom_call.1} parent=1 // pred_fallthru
      _
    // Predicated region
    $region38: #{tpu_custom_call.1} parent=1 // pred_check
      _
    $region39: #{tpu_custom_call.1} parent=1 // pred_check_branch
      %67 = sbr.rel (0) target = $region41
    $region40: #{tpu_custom_call.1} parent=1 // pred_region
      %s69 = ssub.s32 2432, 2432
      %70 = vsyncadd [#allocation9], %s69
      %s71 = sshll.u32 [#allocation8], 4
      %s72 = int_to_ptr.vmem [resolvable:$true] %s71
      %77 = dma.hbm_to_vmem [thread:$0]  %s9, 2432, %s72, [#allocation9], 64, 64, 4
    $region41: #{tpu_custom_call.1} parent=1 // pred_fallthru
      _
    // Predicated region
    $region42: #{tpu_custom_call.1} parent=1 // pred_check
      _
    $region43: #{tpu_custom_call.1} parent=1 // pred_check_branch
      %79 = sbr.rel (0) target = $region45
    $region44: #{tpu_custom_call.1} parent=1 // pred_region
      _
    $region45: #{tpu_custom_call.1} parent=1 // pred_fallthru
      _
    // Predicated region
    $region46: #{tpu_custom_call.1} parent=1 // pred_check
      _
    $region47: #{tpu_custom_call.1} parent=1 // pred_check_branch
      %81 = sbr.rel (0) target = $region49
    $region48: #{tpu_custom_call.1} parent=1 // pred_region
      %82 = dma.done [#allocation3], 128
    $region49: #{tpu_custom_call.1} parent=1 // pred_fallthru
      _
    // Predicated region
    $region50: #{tpu_custom_call.1} parent=1 // pred_check
      _
    $region51: #{tpu_custom_call.1} parent=1 // pred_check_branch
      %84 = sbr.rel (0) target = $region53
    $region52: #{tpu_custom_call.1} parent=1 // pred_region
      %85 = dma.done [#allocation6], 512
    $region53: #{tpu_custom_call.1} parent=1 // pred_fallthru
      _
    // Predicated region
    $region54: #{tpu_custom_call.1} parent=1 // pred_check
      _
    $region55: #{tpu_custom_call.1} parent=1 // pred_check_branch
      %87 = sbr.rel (0) target = $region57
    $region56: #{tpu_custom_call.1} parent=1 // pred_region
      %88 = dma.done [#allocation6], 9600
    $region57: #{tpu_custom_call.1} parent=1 // pred_fallthru
      _
    // Predicated region
    $region58: #{tpu_custom_call.1} parent=1 // pred_check
      _
    $region59: #{tpu_custom_call.1} parent=1 // pred_check_branch
      %90 = sbr.rel (0) target = $region61
    $region60: #{tpu_custom_call.1} parent=1 // pred_region
      %91 = dma.done [#allocation9], 2432
    $region61: #{tpu_custom_call.1} parent=1 // pred_fallthru
      _
    %v93 = vld [vmem:[#allocation2] sm:$0xff]
    %v94 = vpack.c.bf16 %v93, %v93
    %v95 = vld [vmem:[#allocation5] sm:$0xff]
    %v96 = vld [vmem:[#allocation5 + $0x8] sm:$0xff]
    %v97 = vld [vmem:[#allocation5 + $0x10] sm:$0xff]
    %v98 = vld [vmem:[#allocation5 + $0x18] sm:$0xff]
    %v99 = vld [vmem:[%s2] sm:$0xf]
    %v101 = vlaneseq
    %v102 = vshrl.u32 %v101, 7
    %v103 = vsub.s32 0, %v102
    %v104 = vrot.slane %v99, %v103
    %v105 = vlaneseq
    %v106 = vshrl.u32 %v105, 7
    %v107 = vsub.s32 1, %v106
    %v108 = vrot.slane %v99, %v107
    %v109 = vlaneseq
    %v110 = vshrl.u32 %v109, 7
    %v111 = vsub.s32 2, %v110
    %v112 = vrot.slane %v99, %v111
    %v113 = vlaneseq
    %v114 = vshrl.u32 %v113, 7
    %v115 = vsub.s32 3, %v114
    %v116 = vrot.slane %v99, %v115
    %v125 = vunpack.c.l.b16 %v95
    %v126 = vunpack.c.h.b16 %v95
    %v127 = vunpack.c.l.b16 %v96
    %v128 = vunpack.c.h.b16 %v96
    %v129 = vunpack.c.l.b16 %v97
    %v130 = vunpack.c.h.b16 %v97
    %v131 = vunpack.c.l.b16 %v98
    %v132 = vunpack.c.h.b16 %v98
    %v133 = vpack.c.b16 %v129, %v125
    %v134 = vpack.c.b16 %v130, %v126
    %v135 = vpack.c.b16 %v131, %v127
    %v136 = vpack.c.b16 %v132, %v128
    %vm141 = vcmask 130048
    %v143 = vsel %vm141, %v94, 0
    %145 = vmatprep.subr.bf16.mxu0 %v134
    %146 = vmatpush1.bf16.msra.mxu0 %v133
    %147 = vmatprep.subr.bf16.mxu0 0
    %148 = vmatpush1.bf16.msra.mxu0 0
    %149 = vmatprep.subr.bf16.mxu0 0
    %150 = vmatpush1.bf16.msra.mxu0 0
    %151 = vmatprep.subr.bf16.mxu0 0
    %152 = vmatpush1.bf16.msra.mxu0 0
    %153 = vmatprep.subr.bf16.mxu0 0
    %154 = vmatpush1.bf16.msra.mxu0 0
    %155 = vmatprep.subr.bf16.mxu0 0
    %156 = vmatpush1.bf16.msra.mxu0 0
    %157 = vmatprep.subr.bf16.mxu0 0
    %158 = vmatpush1.bf16.msra.mxu0 0
    %159 = vmatprep.subr.bf16.mxu0 0
    %160 = vmatpush1.bf16.msra.mxu0 0
    %161 = vmatprep.subr.bf16.mxu0 0
    %162 = vmatpush1.bf16.msra.mxu0 0
    %163 = vmatprep.subr.bf16.mxu0 0
    %164 = vmatpush1.bf16.msra.mxu0 0
    %165 = vmatprep.subr.bf16.mxu0 0
    %166 = vmatpush1.bf16.msra.mxu0 0
    %167 = vmatprep.subr.bf16.mxu0 0
    %168 = vmatpush1.bf16.msra.mxu0 0
    %169 = vmatprep.subr.bf16.mxu0 0
    %170 = vmatpush1.bf16.msra.mxu0 0
    %171 = vmatprep.subr.bf16.mxu0 0
    %172 = vmatpush1.bf16.msra.mxu0 0
    %173 = vmatprep.subr.bf16.mxu0 0
    %174 = vmatpush1.bf16.msra.mxu0 0
    %175 = vmatprep.subr.bf16.mxu0 0
    %176 = vmatpush1.bf16.msra.mxu0 0
    %177 = vmatprep.mubr.bf16.mxu0 0
    %178 = vmatmul.mubr.bf16.gmra.mrb[0].mxu0 %v143
    %v179 = vpop.f32.mrb[0].mxu0
    %v180 = vadd.f32 %v104, %v179
    %v181 = vpop.f32.mrb[0].mxu0
    %v182 = vadd.f32 %v108, %v181
    %v183 = vpop.f32.mrb[0].mxu0
    %v184 = vpop.f32.mrb[0].mxu0
    %185 = vdwg.mxu0
    %186 = vmatprep.subr.bf16.mxu0 %v136
    %187 = vmatpush1.bf16.msra.mxu0 %v135
    %188 = vmatprep.subr.bf16.mxu0 0
    %189 = vmatpush1.bf16.msra.mxu0 0
    %190 = vmatprep.subr.bf16.mxu0 0
    %191 = vmatpush1.bf16.msra.mxu0 0
    %192 = vmatprep.subr.bf16.mxu0 0
    %193 = vmatpush1.bf16.msra.mxu0 0
    %194 = vmatprep.subr.bf16.mxu0 0
    %195 = vmatpush1.bf16.msra.mxu0 0
    %196 = vmatprep.subr.bf16.mxu0 0
    %197 = vmatpush1.bf16.msra.mxu0 0
    %198 = vmatprep.subr.bf16.mxu0 0
    %199 = vmatpush1.bf16.msra.mxu0 0
    %200 = vmatprep.subr.bf16.mxu0 0
    %201 = vmatpush1.bf16.msra.mxu0 0
    %202 = vmatprep.subr.bf16.mxu0 0
    %203 = vmatpush1.bf16.msra.mxu0 0
    %204 = vmatprep.subr.bf16.mxu0 0
    %205 = vmatpush1.bf16.msra.mxu0 0
    %206 = vmatprep.subr.bf16.mxu0 0
    %207 = vmatpush1.bf16.msra.mxu0 0
    %208 = vmatprep.subr.bf16.mxu0 0
    %209 = vmatpush1.bf16.msra.mxu0 0
    %210 = vmatprep.subr.bf16.mxu0 0
    %211 = vmatpush1.bf16.msra.mxu0 0
    %212 = vmatprep.subr.bf16.mxu0 0
    %213 = vmatpush1.bf16.msra.mxu0 0
    %214 = vmatprep.subr.bf16.mxu0 0
    %215 = vmatpush1.bf16.msra.mxu0 0
    %216 = vmatprep.subr.bf16.mxu0 0
    %217 = vmatpush1.bf16.msra.mxu0 0
    %218 = vmatprep.mubr.bf16.mxu0 0
    %219 = vmatmul.mubr.bf16.gmra.mrb[0].mxu0 %v143
    %v220 = vpop.f32.mrb[0].mxu0
    %v221 = vadd.f32 %v112, %v220
    %v222 = vpop.f32.mrb[0].mxu0
    %v223 = vadd.f32 %v116, %v222
    %v224 = vpop.f32.mrb[0].mxu0
    %v225 = vpop.f32.mrb[0].mxu0
    %226 = vdwg.mxu0
    %v227 = vld [vmem:[%s3] sm:$0xf]
    %v228 = vld [vmem:[%s4] sm:$0xf]
    %v229 = vadd.f32 %v180, %v182
    %v230 = vadd.f32 %v229, %v221
    %v231 = vsel %vm141, %v223, 0.0
    %v232 = vadd.f32 %v230, %v231
    %233 = vadd.xlane.f32.xlu0 %v232
    %v234 = vpop.xlane.xlu0 %233
    %v235 = vrcp.pop 400.0
    %v236 = vmul.f32 %v234, %v235
    %v237 = vsub.f32 %v180, %v236
    %v238 = vsub.f32 %v182, %v236
    %v239 = vsub.f32 %v221, %v236
    %v240 = vsub.f32 %v223, %v236
    %v241 = vmul.f32 %v237, %v237
    %v242 = vmul.f32 %v238, %v238
    %v243 = vmul.f32 %v239, %v239
    %v244 = vmul.f32 %v240, %v240
    %v245 = vadd.f32 %v241, %v242
    %v246 = vadd.f32 %v245, %v243
    %v247 = vsel %vm141, %v244, 0.0
    %v248 = vadd.f32 %v246, %v247
    %249 = vadd.xlane.f32.xlu0 %v248
    %v250 = vpop.xlane.xlu0 %249
    %v251 = vmul.f32 %v250, %v235
    %v252 = vadd.f32 %v251, 1e-05
    %v253 = vrsqrt.pop %v252
    %v254 = vmul.f32 %v237, %v253
    %v255 = vmul.f32 %v238, %v253
    %v256 = vmul.f32 %v239, %v253
    %v257 = vmul.f32 %v240, %v253
    %v259 = vlaneseq
    %v260 = vshrl.u32 %v259, 7
    %v261 = vsub.s32 0, %v260
    %v262 = vrot.slane %v227, %v261
    %v263 = vlaneseq
    %v264 = vshrl.u32 %v263, 7
    %v265 = vsub.s32 1, %v264
    %v266 = vrot.slane %v227, %v265
    %v267 = vlaneseq
    %v268 = vshrl.u32 %v267, 7
    %v269 = vsub.s32 2, %v268
    %v270 = vrot.slane %v227, %v269
    %v271 = vlaneseq
    %v272 = vshrl.u32 %v271, 7
    %v273 = vsub.s32 3, %v272
    %v274 = vrot.slane %v227, %v273
    %v279 = vmul.f32 %v254, %v262
    %v280 = vmul.f32 %v255, %v266
    %v281 = vmul.f32 %v256, %v270
    %v282 = vmul.f32 %v257, %v274
    %v284 = vlaneseq
    %v285 = vshrl.u32 %v284, 7
    %v286 = vsub.s32 0, %v285
    %v287 = vrot.slane %v228, %v286
    %v288 = vlaneseq
    %v289 = vshrl.u32 %v288, 7
    %v290 = vsub.s32 1, %v289
    %v291 = vrot.slane %v228, %v290
    %v292 = vlaneseq
    %v293 = vshrl.u32 %v292, 7
    %v294 = vsub.s32 2, %v293
    %v295 = vrot.slane %v228, %v294
    %v296 = vlaneseq
    %v297 = vshrl.u32 %v296, 7
    %v298 = vsub.s32 3, %v297
    %v299 = vrot.slane %v228, %v298
    %v304 = vadd.f32 %v279, %v287
    %v305 = vadd.f32 %v280, %v291
    %v306 = vadd.f32 %v281, %v295
    %v307 = vadd.f32 %v282, %v299
    %v308 = vmax.f32 %v304, 0.0
    %v309 = vmax.f32 %v305, 0.0
    %v310 = vmax.f32 %v306, 0.0
    %v311 = vmax.f32 %v307, 0.0
    %v312 = vpack.c.bf16 %v308, %v308
    %v313 = vpack.c.bf16 %v309, %v309
    %v314 = vpack.c.bf16 %v310, %v310
    %v315 = vpack.c.bf16 %v311, %v311
    %v316 = vld [vmem:[#allocation7] sm:$0xff]
    %v317 = vld [vmem:[#allocation7 + $0x8] sm:$0xf]
    %v318 = vld [vmem:[#allocation7 + $0xc] sm:$0xff]
    %v319 = vld [vmem:[#allocation7 + $0x14] sm:$0xf]
    %v320 = vld [vmem:[#allocation7 + $0x18] sm:$0xff]
    %v321 = vld [vmem:[#allocation7 + $0x20] sm:$0xf]
    %v322 = vld [vmem:[#allocation7 + $0x24] sm:$0xff]
    %v323 = vld [vmem:[#allocation7 + $0x2c] sm:$0xf]
    %v324 = vld [vmem:[#allocation7 + $0x30] sm:$0xff]
    %v325 = vld [vmem:[#allocation7 + $0x38] sm:$0xf]
    %v326 = vld [vmem:[#allocation7 + $0x3c] sm:$0xff]
    %v327 = vld [vmem:[#allocation7 + $0x44] sm:$0xf]
    %v328 = vld [vmem:[#allocation7 + $0x48] sm:$0xff]
    %v329 = vld [vmem:[#allocation7 + $0x50] sm:$0xf]
    %v330 = vld [vmem:[#allocation7 + $0x54] sm:$0xff]
    %v331 = vld [vmem:[#allocation7 + $0x5c] sm:$0xf]
    %v332 = vld [vmem:[#allocation7 + $0x60] sm:$0xff]
    %v333 = vld [vmem:[#allocation7 + $0x68] sm:$0xf]
    %v334 = vld [vmem:[#allocation7 + $0x6c] sm:$0xff]
    %v335 = vld [vmem:[#allocation7 + $0x74] sm:$0xf]
    %v336 = vld [vmem:[#allocation7 + $0x78] sm:$0xff]
    %v337 = vld [vmem:[#allocation7 + $0x80] sm:$0xf]
    %v338 = vld [vmem:[#allocation7 + $0x84] sm:$0xff]
    %v339 = vld [vmem:[#allocation7 + $0x8c] sm:$0xf]
    %v340 = vld [vmem:[#allocation7 + $0x90] sm:$0xff]
    %v341 = vld [vmem:[#allocation7 + $0x98] sm:$0xf]
    %v342 = vld [vmem:[#allocation7 + $0x9c] sm:$0xff]
    %v343 = vld [vmem:[#allocation7 + $0xa4] sm:$0xf]
    %v344 = vld [vmem:[#allocation7 + $0xa8] sm:$0xff]
    %v345 = vld [vmem:[#allocation7 + $0xb0] sm:$0xf]
    %v346 = vld [vmem:[#allocation7 + $0xb4] sm:$0xff]
    %v347 = vld [vmem:[#allocation7 + $0xbc] sm:$0xf]
    %v348 = vld [vmem:[#allocation7 + $0xc0] sm:$0xff]
    %v349 = vld [vmem:[#allocation7 + $0xc8] sm:$0xf]
    %v350 = vld [vmem:[#allocation7 + $0xcc] sm:$0xff]
    %v351 = vld [vmem:[#allocation7 + $0xd4] sm:$0xf]
    %v352 = vld [vmem:[#allocation7 + $0xd8] sm:$0xff]
    %v353 = vld [vmem:[#allocation7 + $0xe0] sm:$0xf]
    %v354 = vld [vmem:[#allocation7 + $0xe4] sm:$0xff]
    %v355 = vld [vmem:[#allocation7 + $0xec] sm:$0xf]
    %v356 = vld [vmem:[#allocation7 + $0xf0] sm:$0xff]
    %v357 = vld [vmem:[#allocation7 + $0xf8] sm:$0xf]
    %v358 = vld [vmem:[#allocation7 + $0xfc] sm:$0xff]
    %v359 = vld [vmem:[#allocation7 + $0x104] sm:$0xf]
    %v360 = vld [vmem:[#allocation7 + $0x108] sm:$0xff]
    %v361 = vld [vmem:[#allocation7 + $0x110] sm:$0xf]
    %v362 = vld [vmem:[#allocation7 + $0x114] sm:$0xff]
    %v363 = vld [vmem:[#allocation7 + $0x11c] sm:$0xf]
    %v364 = vld [vmem:[#allocation7 + $0x120] sm:$0xff]
    %v365 = vld [vmem:[#allocation7 + $0x128] sm:$0xf]
    %v366 = vld [vmem:[#allocation7 + $0x12c] sm:$0xff]
    %v367 = vld [vmem:[#allocation7 + $0x134] sm:$0xf]
    %v368 = vld [vmem:[#allocation7 + $0x138] sm:$0xff]
    %v369 = vld [vmem:[#allocation7 + $0x140] sm:$0xf]
    %v370 = vld [vmem:[#allocation7 + $0x144] sm:$0xff]
    %v371 = vld [vmem:[#allocation7 + $0x14c] sm:$0xf]
    %v372 = vld [vmem:[#allocation7 + $0x150] sm:$0xff]
    %v373 = vld [vmem:[#allocation7 + $0x158] sm:$0xf]
    %v374 = vld [vmem:[#allocation7 + $0x15c] sm:$0xff]
    %v375 = vld [vmem:[#allocation7 + $0x164] sm:$0xf]
    %v376 = vld [vmem:[#allocation7 + $0x168] sm:$0xff]
    %v377 = vld [vmem:[#allocation7 + $0x170] sm:$0xf]
    %v378 = vld [vmem:[#allocation7 + $0x174] sm:$0xff]
    %v379 = vld [vmem:[#allocation7 + $0x17c] sm:$0xf]
    %v380 = vld [vmem:[#allocation7 + $0x180] sm:$0xff]
    %v381 = vld [vmem:[#allocation7 + $0x188] sm:$0xf]
    %v382 = vld [vmem:[#allocation7 + $0x18c] sm:$0xff]
    %v383 = vld [vmem:[#allocation7 + $0x194] sm:$0xf]
    %v384 = vld [vmem:[#allocation7 + $0x198] sm:$0xff]
    %v385 = vld [vmem:[#allocation7 + $0x1a0] sm:$0xf]
    %v386 = vld [vmem:[#allocation7 + $0x1a4] sm:$0xff]
    %v387 = vld [vmem:[#allocation7 + $0x1ac] sm:$0xf]
    %v388 = vld [vmem:[#allocation7 + $0x1b0] sm:$0xff]
    %v389 = vld [vmem:[#allocation7 + $0x1b8] sm:$0xf]
    %v390 = vld [vmem:[#allocation7 + $0x1bc] sm:$0xff]
    %v391 = vld [vmem:[#allocation7 + $0x1c4] sm:$0xf]
    %v392 = vld [vmem:[#allocation7 + $0x1c8] sm:$0xff]
    %v393 = vld [vmem:[#allocation7 + $0x1d0] sm:$0xf]
    %v394 = vld [vmem:[#allocation7 + $0x1d4] sm:$0xff]
    %v395 = vld [vmem:[#allocation7 + $0x1dc] sm:$0xf]
    %v396 = vld [vmem:[#allocation7 + $0x1e0] sm:$0xff]
    %v397 = vld [vmem:[#allocation7 + $0x1e8] sm:$0xf]
    %v398 = vld [vmem:[#allocation7 + $0x1ec] sm:$0xff]
    %v399 = vld [vmem:[#allocation7 + $0x1f4] sm:$0xf]
    %v400 = vld [vmem:[#allocation7 + $0x1f8] sm:$0xff]
    %v401 = vld [vmem:[#allocation7 + $0x200] sm:$0xf]
    %v402 = vld [vmem:[#allocation7 + $0x204] sm:$0xff]
    %v403 = vld [vmem:[#allocation7 + $0x20c] sm:$0xf]
    %v404 = vld [vmem:[#allocation7 + $0x210] sm:$0xff]
    %v405 = vld [vmem:[#allocation7 + $0x218] sm:$0xf]
    %v406 = vld [vmem:[#allocation7 + $0x21c] sm:$0xff]
    %v407 = vld [vmem:[#allocation7 + $0x224] sm:$0xf]
    %v408 = vld [vmem:[#allocation7 + $0x228] sm:$0xff]
    %v409 = vld [vmem:[#allocation7 + $0x230] sm:$0xf]
    %v410 = vld [vmem:[#allocation7 + $0x234] sm:$0xff]
    %v411 = vld [vmem:[#allocation7 + $0x23c] sm:$0xf]
    %v412 = vld [vmem:[#allocation7 + $0x240] sm:$0xff]
    %v413 = vld [vmem:[#allocation7 + $0x248] sm:$0xf]
    %v414 = vld [vmem:[#allocation7 + $0x24c] sm:$0xff]
    %v415 = vld [vmem:[#allocation7 + $0x254] sm:$0xf]
    %v416 = vld [vmem:[%s6] sm:$0x7]
    %v418 = vlaneseq
    %v419 = vshrl.u32 %v418, 7
    %v420 = vsub.s32 0, %v419
    %v421 = vrot.slane %v416, %v420
    %v422 = vlaneseq
    %v423 = vshrl.u32 %v422, 7
    %v424 = vsub.s32 1, %v423
    %v425 = vrot.slane %v416, %v424
    %v426 = vlaneseq
    %v427 = vshrl.u32 %v426, 7
    %v428 = vsub.s32 2, %v427
    %v429 = vrot.slane %v416, %v428
    %v533 = vunpack.c.l.b16 %v316
    %v534 = vunpack.c.h.b16 %v316
    %v535 = vunpack.c.l.b16 %v317
    %v536 = vunpack.c.l.b16 %v318
    %v537 = vunpack.c.h.b16 %v318
    %v538 = vunpack.c.l.b16 %v319
    %v539 = vunpack.c.l.b16 %v320
    %v540 = vunpack.c.h.b16 %v320
    %v541 = vunpack.c.l.b16 %v321
    %v542 = vunpack.c.l.b16 %v322
    %v543 = vunpack.c.h.b16 %v322
    %v544 = vunpack.c.l.b16 %v323
    %v545 = vunpack.c.l.b16 %v324
    %v546 = vunpack.c.h.b16 %v324
    %v547 = vunpack.c.l.b16 %v325
    %v548 = vunpack.c.l.b16 %v326
    %v549 = vunpack.c.h.b16 %v326
    %v550 = vunpack.c.l.b16 %v327
    %v551 = vunpack.c.l.b16 %v328
    %v552 = vunpack.c.h.b16 %v328
    %v553 = vunpack.c.l.b16 %v329
    %v554 = vunpack.c.l.b16 %v330
    %v555 = vunpack.c.h.b16 %v330
    %v556 = vunpack.c.l.b16 %v331
    %v557 = vunpack.c.l.b16 %v332
    %v558 = vunpack.c.h.b16 %v332
    %v559 = vunpack.c.l.b16 %v333
    %v560 = vunpack.c.l.b16 %v334
    %v561 = vunpack.c.h.b16 %v334
    %v562 = vunpack.c.l.b16 %v335
    %v563 = vunpack.c.l.b16 %v336
    %v564 = vunpack.c.h.b16 %v336
    %v565 = vunpack.c.l.b16 %v337
    %v566 = vunpack.c.l.b16 %v338
    %v567 = vunpack.c.h.b16 %v338
    %v568 = vunpack.c.l.b16 %v339
    %v569 = vunpack.c.l.b16 %v340
    %v570 = vunpack.c.h.b16 %v340
    %v571 = vunpack.c.l.b16 %v341
    %v572 = vunpack.c.l.b16 %v342
    %v573 = vunpack.c.h.b16 %v342
    %v574 = vunpack.c.l.b16 %v343
    %v575 = vunpack.c.l.b16 %v344
    %v576 = vunpack.c.h.b16 %v344
    %v577 = vunpack.c.l.b16 %v345
    %v578 = vunpack.c.l.b16 %v346
    %v579 = vunpack.c.h.b16 %v346
    %v580 = vunpack.c.l.b16 %v347
    %v581 = vunpack.c.l.b16 %v348
    %v582 = vunpack.c.h.b16 %v348
    %v583 = vunpack.c.l.b16 %v349
    %v584 = vunpack.c.l.b16 %v350
    %v585 = vunpack.c.h.b16 %v350
    %v586 = vunpack.c.l.b16 %v351
    %v587 = vunpack.c.l.b16 %v352
    %v588 = vunpack.c.h.b16 %v352
    %v589 = vunpack.c.l.b16 %v353
    %v590 = vunpack.c.l.b16 %v354
    %v591 = vunpack.c.h.b16 %v354
    %v592 = vunpack.c.l.b16 %v355
    %v593 = vunpack.c.l.b16 %v356
    %v594 = vunpack.c.h.b16 %v356
    %v595 = vunpack.c.l.b16 %v357
    %v596 = vunpack.c.l.b16 %v358
    %v597 = vunpack.c.h.b16 %v358
    %v598 = vunpack.c.l.b16 %v359
    %v599 = vunpack.c.l.b16 %v360
    %v600 = vunpack.c.h.b16 %v360
    %v601 = vunpack.c.l.b16 %v361
    %v602 = vunpack.c.l.b16 %v362
    %v603 = vunpack.c.h.b16 %v362
    %v604 = vunpack.c.l.b16 %v363
    %v605 = vunpack.c.l.b16 %v364
    %v606 = vunpack.c.h.b16 %v364
    %v607 = vunpack.c.l.b16 %v365
    %v608 = vunpack.c.l.b16 %v366
    %v609 = vunpack.c.h.b16 %v366
    %v610 = vunpack.c.l.b16 %v367
    %v611 = vunpack.c.l.b16 %v368
    %v612 = vunpack.c.h.b16 %v368
    %v613 = vunpack.c.l.b16 %v369
    %v614 = vunpack.c.l.b16 %v370
    %v615 = vunpack.c.h.b16 %v370
    %v616 = vunpack.c.l.b16 %v371
    %v617 = vunpack.c.l.b16 %v372
    %v618 = vunpack.c.h.b16 %v372
    %v619 = vunpack.c.l.b16 %v373
    %v620 = vunpack.c.l.b16 %v374
    %v621 = vunpack.c.h.b16 %v374
    %v622 = vunpack.c.l.b16 %v375
    %v623 = vunpack.c.l.b16 %v376
    %v624 = vunpack.c.h.b16 %v376
    %v625 = vunpack.c.l.b16 %v377
    %v626 = vunpack.c.l.b16 %v378
    %v627 = vunpack.c.h.b16 %v378
    %v628 = vunpack.c.l.b16 %v379
    %v629 = vunpack.c.l.b16 %v380
    %v630 = vunpack.c.h.b16 %v380
    %v631 = vunpack.c.l.b16 %v381
    %v632 = vunpack.c.l.b16 %v382
    %v633 = vunpack.c.h.b16 %v382
    %v634 = vunpack.c.l.b16 %v383
    %v635 = vunpack.c.l.b16 %v384
    %v636 = vunpack.c.h.b16 %v384
    %v637 = vunpack.c.l.b16 %v385
    %v638 = vunpack.c.l.b16 %v386
    %v639 = vunpack.c.h.b16 %v386
    %v640 = vunpack.c.l.b16 %v387
    %v641 = vunpack.c.l.b16 %v388
    %v642 = vunpack.c.h.b16 %v388
    %v643 = vunpack.c.l.b16 %v389
    %v644 = vunpack.c.l.b16 %v390
    %v645 = vunpack.c.h.b16 %v390
    %v646 = vunpack.c.l.b16 %v391
    %v647 = vunpack.c.l.b16 %v392
    %v648 = vunpack.c.h.b16 %v392
    %v649 = vunpack.c.l.b16 %v393
    %v650 = vunpack.c.l.b16 %v394
    %v651 = vunpack.c.h.b16 %v394
    %v652 = vunpack.c.l.b16 %v395
    %v653 = vunpack.c.l.b16 %v396
    %v654 = vunpack.c.h.b16 %v396
    %v655 = vunpack.c.l.b16 %v397
    %v656 = vunpack.c.l.b16 %v398
    %v657 = vunpack.c.h.b16 %v398
    %v658 = vunpack.c.l.b16 %v399
    %v659 = vunpack.c.l.b16 %v400
    %v660 = vunpack.c.h.b16 %v400
    %v661 = vunpack.c.l.b16 %v401
    %v662 = vunpack.c.l.b16 %v402
    %v663 = vunpack.c.h.b16 %v402
    %v664 = vunpack.c.l.b16 %v403
    %v665 = vunpack.c.l.b16 %v404
    %v666 = vunpack.c.h.b16 %v404
    %v667 = vunpack.c.l.b16 %v405
    %v668 = vunpack.c.l.b16 %v406
    %v669 = vunpack.c.h.b16 %v406
    %v670 = vunpack.c.l.b16 %v407
    %v671 = vunpack.c.l.b16 %v408
    %v672 = vunpack.c.h.b16 %v408
    %v673 = vunpack.c.l.b16 %v409
    %v674 = vunpack.c.l.b16 %v410
    %v675 = vunpack.c.h.b16 %v410
    %v676 = vunpack.c.l.b16 %v411
    %v677 = vunpack.c.l.b16 %v412
    %v678 = vunpack.c.h.b16 %v412
    %v679 = vunpack.c.l.b16 %v413
    %v680 = vunpack.c.l.b16 %v414
    %v681 = vunpack.c.h.b16 %v414
    %v682 = vunpack.c.l.b16 %v415
    %v683 = vpack.c.b16 %v536, %v533
    %v684 = vpack.c.b16 %v537, %v534
    %v685 = vpack.c.b16 %v538, %v535
    %v686 = vpack.c.b16 %v542, %v539
    %v687 = vpack.c.b16 %v543, %v540
    %v688 = vpack.c.b16 %v544, %v541
    %v689 = vpack.c.b16 %v548, %v545
    %v690 = vpack.c.b16 %v549, %v546
    %v691 = vpack.c.b16 %v550, %v547
    %v692 = vpack.c.b16 %v554, %v551
    %v693 = vpack.c.b16 %v555, %v552
    %v694 = vpack.c.b16 %v556, %v553
    %v695 = vpack.c.b16 %v560, %v557
    %v696 = vpack.c.b16 %v561, %v558
    %v697 = vpack.c.b16 %v562, %v559
    %v698 = vpack.c.b16 %v566, %v563
    %v699 = vpack.c.b16 %v567, %v564
    %v700 = vpack.c.b16 %v568, %v565
    %v701 = vpack.c.b16 %v572, %v569
    %v702 = vpack.c.b16 %v573, %v570
    %v703 = vpack.c.b16 %v574, %v571
    %v704 = vpack.c.b16 %v578, %v575
    %v705 = vpack.c.b16 %v579, %v576
    %v706 = vpack.c.b16 %v580, %v577
    %v707 = vpack.c.b16 %v584, %v581
    %v708 = vpack.c.b16 %v585, %v582
    %v709 = vpack.c.b16 %v586, %v583
    %v710 = vpack.c.b16 %v590, %v587
    %v711 = vpack.c.b16 %v591, %v588
    %v712 = vpack.c.b16 %v592, %v589
    %v713 = vpack.c.b16 %v596, %v593
    %v714 = vpack.c.b16 %v597, %v594
    %v715 = vpack.c.b16 %v598, %v595
    %v716 = vpack.c.b16 %v602, %v599
    %v717 = vpack.c.b16 %v603, %v600
    %v718 = vpack.c.b16 %v604, %v601
    %v719 = vpack.c.b16 %v608, %v605
    %v720 = vpack.c.b16 %v609, %v606
    %v721 = vpack.c.b16 %v610, %v607
    %v722 = vpack.c.b16 %v614, %v611
    %v723 = vpack.c.b16 %v615, %v612
    %v724 = vpack.c.b16 %v616, %v613
    %v725 = vpack.c.b16 %v620, %v617
    %v726 = vpack.c.b16 %v621, %v618
    %v727 = vpack.c.b16 %v622, %v619
    %v728 = vpack.c.b16 %v626, %v623
    %v729 = vpack.c.b16 %v627, %v624
    %v730 = vpack.c.b16 %v628, %v625
    %v731 = vpack.c.b16 %v632, %v629
    %v732 = vpack.c.b16 %v633, %v630
    %v733 = vpack.c.b16 %v634, %v631
    %v734 = vpack.c.b16 %v638, %v635
    %v735 = vpack.c.b16 %v639, %v636
    %v736 = vpack.c.b16 %v640, %v637
    %v737 = vpack.c.b16 %v644, %v641
    %v738 = vpack.c.b16 %v645, %v642
    %v739 = vpack.c.b16 %v646, %v643
    %v740 = vpack.c.b16 %v650, %v647
    %v741 = vpack.c.b16 %v651, %v648
    %v742 = vpack.c.b16 %v652, %v649
    %v743 = vpack.c.b16 %v656, %v653
    %v744 = vpack.c.b16 %v657, %v654
    %v745 = vpack.c.b16 %v658, %v655
    %v746 = vpack.c.b16 %v662, %v659
    %v747 = vpack.c.b16 %v663, %v660
    %v748 = vpack.c.b16 %v664, %v661
    %v749 = vpack.c.b16 %v668, %v665
    %v750 = vpack.c.b16 %v669, %v666
    %v751 = vpack.c.b16 %v670, %v667
    %v752 = vpack.c.b16 %v674, %v671
    %v753 = vpack.c.b16 %v675, %v672
    %v754 = vpack.c.b16 %v676, %v673
    %v755 = vpack.c.b16 %v680, %v677
    %v756 = vpack.c.b16 %v681, %v678
    %v757 = vpack.c.b16 %v682, %v679
    %v834 = vsel %vm141, %v315, 0
    %836 = vmatprep.subr.bf16.mxu0 %v684
    %837 = vmatpush1.bf16.msra.mxu0 %v683
    %838 = vmatprep.subr.bf16.mxu0 %v687
    %839 = vmatpush1.bf16.msra.mxu0 %v686
    %840 = vmatprep.subr.bf16.mxu0 %v690
    %841 = vmatpush1.bf16.msra.mxu0 %v689
    %842 = vmatprep.subr.bf16.mxu0 %v693
    %843 = vmatpush1.bf16.msra.mxu0 %v692
    %844 = vmatprep.subr.bf16.mxu0 %v696
    %845 = vmatpush1.bf16.msra.mxu0 %v695
    %846 = vmatprep.subr.bf16.mxu0 %v699
    %847 = vmatpush1.bf16.msra.mxu0 %v698
    %848 = vmatprep.subr.bf16.mxu0 %v702
    %849 = vmatpush1.bf16.msra.mxu0 %v701
    %850 = vmatprep.subr.bf16.mxu0 %v705
    %851 = vmatpush1.bf16.msra.mxu0 %v704
    %852 = vmatprep.subr.bf16.mxu0 %v708
    %853 = vmatpush1.bf16.msra.mxu0 %v707
    %854 = vmatprep.subr.bf16.mxu0 %v711
    %855 = vmatpush1.bf16.msra.mxu0 %v710
    %856 = vmatprep.subr.bf16.mxu0 %v714
    %857 = vmatpush1.bf16.msra.mxu0 %v713
    %858 = vmatprep.subr.bf16.mxu0 %v717
    %859 = vmatpush1.bf16.msra.mxu0 %v716
    %860 = vmatprep.subr.bf16.mxu0 %v720
    %861 = vmatpush1.bf16.msra.mxu0 %v719
    %862 = vmatprep.subr.bf16.mxu0 %v723
    %863 = vmatpush1.bf16.msra.mxu0 %v722
    %864 = vmatprep.subr.bf16.mxu0 %v726
    %865 = vmatpush1.bf16.msra.mxu0 %v725
    %866 = vmatprep.subr.bf16.mxu0 %v729
    %867 = vmatpush1.bf16.msra.mxu0 %v728
    %868 = vmatprep.mubr.bf16.mxu0 %v313
    %869 = vmatmul.mubr.bf16.gmra.mrb[0].mxu0 %v312
    %v870 = vpop.f32.mrb[0].mxu0
    %v871 = vadd.f32 %v421, %v870
    %v872 = vpop.f32.mrb[0].mxu0
    %v873 = vadd.f32 %v425, %v872
    %v874 = vpop.f32.mrb[0].mxu0
    %v875 = vpop.f32.mrb[0].mxu0
    %876 = vdwg.mxu0
    %877 = vmatprep.subr.bf16.mxu0 %v732
    %878 = vmatpush1.bf16.msra.mxu0 %v731
    %879 = vmatprep.subr.bf16.mxu0 %v735
    %880 = vmatpush1.bf16.msra.mxu0 %v734
    %881 = vmatprep.subr.bf16.mxu0 %v738
    %882 = vmatpush1.bf16.msra.mxu0 %v737
    %883 = vmatprep.subr.bf16.mxu0 %v741
    %884 = vmatpush1.bf16.msra.mxu0 %v740
    %885 = vmatprep.subr.bf16.mxu0 %v744
    %886 = vmatpush1.bf16.msra.mxu0 %v743
    %887 = vmatprep.subr.bf16.mxu0 %v747
    %888 = vmatpush1.bf16.msra.mxu0 %v746
    %889 = vmatprep.subr.bf16.mxu0 %v750
    %890 = vmatpush1.bf16.msra.mxu0 %v749
    %891 = vmatprep.subr.bf16.mxu0 %v753
    %892 = vmatpush1.bf16.msra.mxu0 %v752
    %893 = vmatprep.subr.bf16.mxu0 %v756
    %894 = vmatpush1.bf16.msra.mxu0 %v755
    %895 = vmatprep.subr.bf16.mxu0 0
    %896 = vmatpush1.bf16.msra.mxu0 0
    %897 = vmatprep.subr.bf16.mxu0 0
    %898 = vmatpush1.bf16.msra.mxu0 0
    %899 = vmatprep.subr.bf16.mxu0 0
    %900 = vmatpush1.bf16.msra.mxu0 0
    %901 = vmatprep.subr.bf16.mxu0 0
    %902 = vmatpush1.bf16.msra.mxu0 0
    %903 = vmatprep.subr.bf16.mxu0 0
    %904 = vmatpush1.bf16.msra.mxu0 0
    %905 = vmatprep.subr.bf16.mxu0 0
    %906 = vmatpush1.bf16.msra.mxu0 0
    %907 = vmatprep.subr.bf16.mxu0 0
    %908 = vmatpush1.bf16.msra.mxu0 0
    %909 = vmatprep.mubr.bf16.mxu0 %v834
    %910 = vmatmul.mubr.bf16.gmra.mrb[0].mxu0 %v314
    %v911 = vpop.f32.mrb[0].mxu0
    %v912 = vadd.f32 %v871, %v911
    %v913 = vpop.f32.mrb[0].mxu0
    %v914 = vadd.f32 %v873, %v913
    %v915 = vpop.f32.mrb[0].mxu0
    %v916 = vpop.f32.mrb[0].mxu0
    %917 = vdwg.mxu0
    %918 = vmatprep.subr.bf16.mxu0 0
    %919 = vmatpush1.bf16.msra.mxu0 %v685
    %920 = vmatprep.subr.bf16.mxu0 0
    %921 = vmatpush1.bf16.msra.mxu0 %v688
    %922 = vmatprep.subr.bf16.mxu0 0
    %923 = vmatpush1.bf16.msra.mxu0 %v691
    %924 = vmatprep.subr.bf16.mxu0 0
    %925 = vmatpush1.bf16.msra.mxu0 %v694
    %926 = vmatprep.subr.bf16.mxu0 0
    %927 = vmatpush1.bf16.msra.mxu0 %v697
    %928 = vmatprep.subr.bf16.mxu0 0
    %929 = vmatpush1.bf16.msra.mxu0 %v700
    %930 = vmatprep.subr.bf16.mxu0 0
    %931 = vmatpush1.bf16.msra.mxu0 %v703
    %932 = vmatprep.subr.bf16.mxu0 0
    %933 = vmatpush1.bf16.msra.mxu0 %v706
    %934 = vmatprep.subr.bf16.mxu0 0
    %935 = vmatpush1.bf16.msra.mxu0 %v709
    %936 = vmatprep.subr.bf16.mxu0 0
    %937 = vmatpush1.bf16.msra.mxu0 %v712
    %938 = vmatprep.subr.bf16.mxu0 0
    %939 = vmatpush1.bf16.msra.mxu0 %v715
    %940 = vmatprep.subr.bf16.mxu0 0
    %941 = vmatpush1.bf16.msra.mxu0 %v718
    %942 = vmatprep.subr.bf16.mxu0 0
    %943 = vmatpush1.bf16.msra.mxu0 %v721
    %944 = vmatprep.subr.bf16.mxu0 0
    %945 = vmatpush1.bf16.msra.mxu0 %v724
    %946 = vmatprep.subr.bf16.mxu0 0
    %947 = vmatpush1.bf16.msra.mxu0 %v727
    %948 = vmatprep.subr.bf16.mxu0 0
    %949 = vmatpush1.bf16.msra.mxu0 %v730
    %950 = vmatprep.mubr.bf16.mxu0 %v313
    %951 = vmatmul.mubr.bf16.gmra.mrb[0].mxu0 %v312
    %v952 = vpop.f32.mrb[0].mxu0
    %v953 = vadd.f32 %v429, %v952
    %v954 = vpop.f32.mrb[0].mxu0
    %v955 = vpop.f32.mrb[0].mxu0
    %v956 = vpop.f32.mrb[0].mxu0
    %957 = vdwg.mxu0
    %958 = vmatprep.subr.bf16.mxu0 0
    %959 = vmatpush1.bf16.msra.mxu0 %v733
    %960 = vmatprep.subr.bf16.mxu0 0
    %961 = vmatpush1.bf16.msra.mxu0 %v736
    %962 = vmatprep.subr.bf16.mxu0 0
    %963 = vmatpush1.bf16.msra.mxu0 %v739
    %964 = vmatprep.subr.bf16.mxu0 0
    %965 = vmatpush1.bf16.msra.mxu0 %v742
    %966 = vmatprep.subr.bf16.mxu0 0
    %967 = vmatpush1.bf16.msra.mxu0 %v745
    %968 = vmatprep.subr.bf16.mxu0 0
    %969 = vmatpush1.bf16.msra.mxu0 %v748
    %970 = vmatprep.subr.bf16.mxu0 0
    %971 = vmatpush1.bf16.msra.mxu0 %v751
    %972 = vmatprep.subr.bf16.mxu0 0
    %973 = vmatpush1.bf16.msra.mxu0 %v754
    %974 = vmatprep.subr.bf16.mxu0 0
    %975 = vmatpush1.bf16.msra.mxu0 %v757
    %976 = vmatprep.subr.bf16.mxu0 0
    %977 = vmatpush1.bf16.msra.mxu0 0
    %978 = vmatprep.subr.bf16.mxu0 0
    %979 = vmatpush1.bf16.msra.mxu0 0
    %980 = vmatprep.subr.bf16.mxu0 0
    %981 = vmatpush1.bf16.msra.mxu0 0
    %982 = vmatprep.subr.bf16.mxu0 0
    %983 = vmatpush1.bf16.msra.mxu0 0
    %984 = vmatprep.subr.bf16.mxu0 0
    %985 = vmatpush1.bf16.msra.mxu0 0
    %986 = vmatprep.subr.bf16.mxu0 0
    %987 = vmatpush1.bf16.msra.mxu0 0
    %988 = vmatprep.subr.bf16.mxu0 0
    %989 = vmatpush1.bf16.msra.mxu0 0
    %990 = vmatprep.mubr.bf16.mxu0 %v834
    %991 = vmatmul.mubr.bf16.gmra.mrb[0].mxu0 %v314
    %v992 = vpop.f32.mrb[0].mxu0
    %v993 = vadd.f32 %v953, %v992
    %v994 = vpop.f32.mrb[0].mxu0
    %v995 = vpop.f32.mrb[0].mxu0
    %v996 = vpop.f32.mrb[0].mxu0
    %997 = vdwg.mxu0
    %v998 = vld [vmem:[%s7] sm:$0x7]
    %v999 = vld [vmem:[%s8] sm:$0x7]
    %v1000 = vadd.f32 %v912, %v914
    %vm1001 = vcmask 359424
    %v1002 = vsel %vm1001, %v993, 0.0
    %v1003 = vadd.f32 %v1000, %v1002
    %1004 = vadd.xlane.f32.xlu0 %v1003
    %v1005 = vpop.xlane.xlu0 %1004
    %v1006 = vrcp.pop 300.0
    %v1007 = vmul.f32 %v1005, %v1006
    %v1008 = vsub.f32 %v912, %v1007
    %v1009 = vsub.f32 %v914, %v1007
    %v1010 = vsub.f32 %v993, %v1007
    %v1011 = vmul.f32 %v1008, %v1008
    %v1012 = vmul.f32 %v1009, %v1009
    %v1013 = vmul.f32 %v1010, %v1010
    %v1014 = vadd.f32 %v1011, %v1012
    %v1015 = vsel %vm1001, %v1013, 0.0
    %v1016 = vadd.f32 %v1014, %v1015
    %1017 = vadd.xlane.f32.xlu0 %v1016
    %v1018 = vpop.xlane.xlu0 %1017
    %v1019 = vmul.f32 %v1018, %v1006
    %v1020 = vadd.f32 %v1019, 1e-05
    %v1021 = vrsqrt.pop %v1020
    %v1022 = vmul.f32 %v1008, %v1021
    %v1023 = vmul.f32 %v1009, %v1021
    %v1024 = vmul.f32 %v1010, %v1021
    %v1026 = vlaneseq
    %v1027 = vshrl.u32 %v1026, 7
    %v1028 = vsub.s32 0, %v1027
    %v1029 = vrot.slane %v998, %v1028
    %v1030 = vlaneseq
    %v1031 = vshrl.u32 %v1030, 7
    %v1032 = vsub.s32 1, %v1031
    %v1033 = vrot.slane %v998, %v1032
    %v1034 = vlaneseq
    %v1035 = vshrl.u32 %v1034, 7
    %v1036 = vsub.s32 2, %v1035
    %v1037 = vrot.slane %v998, %v1036
    %v1041 = vmul.f32 %v1022, %v1029
    %v1042 = vmul.f32 %v1023, %v1033
    %v1043 = vmul.f32 %v1024, %v1037
    %v1045 = vlaneseq
    %v1046 = vshrl.u32 %v1045, 7
    %v1047 = vsub.s32 0, %v1046
    %v1048 = vrot.slane %v999, %v1047
    %v1049 = vlaneseq
    %v1050 = vshrl.u32 %v1049, 7
    %v1051 = vsub.s32 1, %v1050
    %v1052 = vrot.slane %v999, %v1051
    %v1053 = vlaneseq
    %v1054 = vshrl.u32 %v1053, 7
    %v1055 = vsub.s32 2, %v1054
    %v1056 = vrot.slane %v999, %v1055
    %v1060 = vadd.f32 %v1041, %v1048
    %v1061 = vadd.f32 %v1042, %v1052
    %v1062 = vadd.f32 %v1043, %v1056
    %v1063 = vmax.f32 %v1060, 0.0
    %v1064 = vmax.f32 %v1061, 0.0
    %v1065 = vmax.f32 %v1062, 0.0
    %v1066 = vpack.c.bf16 %v1063, %v1063
    %v1067 = vpack.c.bf16 %v1064, %v1064
    %v1068 = vpack.c.bf16 %v1065, %v1065
    %v1069 = vld [vmem:[#allocation8] sm:$0xf]
    %v1070 = vld [vmem:[#allocation8 + $0x4] sm:$0xf]
    %v1071 = vld [vmem:[#allocation8 + $0x8] sm:$0xf]
    %v1072 = vld [vmem:[#allocation8 + $0xc] sm:$0xf]
    %v1073 = vld [vmem:[#allocation8 + $0x10] sm:$0xf]
    %v1074 = vld [vmem:[#allocation8 + $0x14] sm:$0xf]
    %v1075 = vld [vmem:[#allocation8 + $0x18] sm:$0xf]
    %v1076 = vld [vmem:[#allocation8 + $0x1c] sm:$0xf]
    %v1077 = vld [vmem:[#allocation8 + $0x20] sm:$0xf]
    %v1078 = vld [vmem:[#allocation8 + $0x24] sm:$0xf]
    %v1079 = vld [vmem:[#allocation8 + $0x28] sm:$0xf]
    %v1080 = vld [vmem:[#allocation8 + $0x2c] sm:$0xf]
    %v1081 = vld [vmem:[#allocation8 + $0x30] sm:$0xf]
    %v1082 = vld [vmem:[#allocation8 + $0x34] sm:$0xf]
    %v1083 = vld [vmem:[#allocation8 + $0x38] sm:$0xf]
    %v1084 = vld [vmem:[#allocation8 + $0x3c] sm:$0xf]
    %v1085 = vld [vmem:[#allocation8 + $0x40] sm:$0xf]
    %v1086 = vld [vmem:[#allocation8 + $0x44] sm:$0xf]
    %v1087 = vld [vmem:[#allocation8 + $0x48] sm:$0xf]
    %v1088 = vld [vmem:[#allocation8 + $0x4c] sm:$0xf]
    %v1089 = vld [vmem:[#allocation8 + $0x50] sm:$0xf]
    %v1090 = vld [vmem:[#allocation8 + $0x54] sm:$0xf]
    %v1091 = vld [vmem:[#allocation8 + $0x58] sm:$0xf]
    %v1092 = vld [vmem:[#allocation8 + $0x5c] sm:$0xf]
    %v1093 = vld [vmem:[#allocation8 + $0x60] sm:$0xf]
    %v1094 = vld [vmem:[#allocation8 + $0x64] sm:$0xf]
    %v1095 = vld [vmem:[#allocation8 + $0x68] sm:$0xf]
    %v1096 = vld [vmem:[#allocation8 + $0x6c] sm:$0xf]
    %v1097 = vld [vmem:[#allocation8 + $0x70] sm:$0xf]
    %v1098 = vld [vmem:[#allocation8 + $0x74] sm:$0xf]
    %v1099 = vld [vmem:[#allocation8 + $0x78] sm:$0xf]
    %v1100 = vld [vmem:[#allocation8 + $0x7c] sm:$0xf]
    %v1101 = vld [vmem:[#allocation8 + $0x80] sm:$0xf]
    %v1102 = vld [vmem:[#allocation8 + $0x84] sm:$0xf]
    %v1103 = vld [vmem:[#allocation8 + $0x88] sm:$0xf]
    %v1104 = vld [vmem:[#allocation8 + $0x8c] sm:$0xf]
    %v1105 = vld [vmem:[#allocation8 + $0x90] sm:$0xf]
    %v1106 = vld [vmem:[#allocation8 + $0x94] sm:$0x3]
    %v1107 = vld [vmem:[%s10] sm:$0x1]
    %v1109 = vlaneseq
    %v1110 = vshrl.u32 %v1109, 7
    %v1111 = vsub.s32 0, %v1110
    %v1112 = vrot.slane %v1107, %v1111
    %v1152 = vunpack.c.l.b16 %v1069
    %v1153 = vunpack.c.l.b16 %v1070
    %v1154 = vunpack.c.l.b16 %v1071
    %v1155 = vunpack.c.l.b16 %v1072
    %v1156 = vunpack.c.l.b16 %v1073
    %v1157 = vunpack.c.l.b16 %v1074
    %v1158 = vunpack.c.l.b16 %v1075
    %v1159 = vunpack.c.l.b16 %v1076
    %v1160 = vunpack.c.l.b16 %v1077
    %v1161 = vunpack.c.l.b16 %v1078
    %v1162 = vunpack.c.l.b16 %v1079
    %v1163 = vunpack.c.l.b16 %v1080
    %v1164 = vunpack.c.l.b16 %v1081
    %v1165 = vunpack.c.l.b16 %v1082
    %v1166 = vunpack.c.l.b16 %v1083
    %v1167 = vunpack.c.l.b16 %v1084
    %v1168 = vunpack.c.l.b16 %v1085
    %v1169 = vunpack.c.l.b16 %v1086
    %v1170 = vunpack.c.l.b16 %v1087
    %v1171 = vunpack.c.l.b16 %v1088
    %v1172 = vunpack.c.l.b16 %v1089
    %v1173 = vunpack.c.l.b16 %v1090
    %v1174 = vunpack.c.l.b16 %v1091
    %v1175 = vunpack.c.l.b16 %v1092
    %v1176 = vunpack.c.l.b16 %v1093
    %v1177 = vunpack.c.l.b16 %v1094
    %v1178 = vunpack.c.l.b16 %v1095
    %v1179 = vunpack.c.l.b16 %v1096
    %v1180 = vunpack.c.l.b16 %v1097
    %v1181 = vunpack.c.l.b16 %v1098
    %v1182 = vunpack.c.l.b16 %v1099
    %v1183 = vunpack.c.l.b16 %v1100
    %v1184 = vunpack.c.l.b16 %v1101
    %v1185 = vunpack.c.l.b16 %v1102
    %v1186 = vunpack.c.l.b16 %v1103
    %v1187 = vunpack.c.l.b16 %v1104
    %v1188 = vunpack.c.l.b16 %v1105
    %v1189 = vunpack.c.l.b16 %v1106
    %v1190 = vpack.c.b16 %v1153, %v1152
    %v1191 = vpack.c.b16 %v1155, %v1154
    %v1192 = vpack.c.b16 %v1157, %v1156
    %v1193 = vpack.c.b16 %v1159, %v1158
    %v1194 = vpack.c.b16 %v1161, %v1160
    %v1195 = vpack.c.b16 %v1163, %v1162
    %v1196 = vpack.c.b16 %v1165, %v1164
    %v1197 = vpack.c.b16 %v1167, %v1166
    %v1198 = vpack.c.b16 %v1169, %v1168
    %v1199 = vpack.c.b16 %v1171, %v1170
    %v1200 = vpack.c.b16 %v1173, %v1172
    %v1201 = vpack.c.b16 %v1175, %v1174
    %v1202 = vpack.c.b16 %v1177, %v1176
    %v1203 = vpack.c.b16 %v1179, %v1178
    %v1204 = vpack.c.b16 %v1181, %v1180
    %v1205 = vpack.c.b16 %v1183, %v1182
    %v1206 = vpack.c.b16 %v1185, %v1184
    %v1207 = vpack.c.b16 %v1187, %v1186
    %v1208 = vpack.c.b16 %v1189, %v1188
    %v1228 = vsel %vm1001, %v1068, 0
    %vm1230 = vcmask 1045504
    %v1232 = vsel %vm1230, %v1208, 0
    %1234 = vmatprep.subr.bf16.mxu0 0
    %1235 = vmatpush1.bf16.msra.mxu0 %v1190
    %1236 = vmatprep.subr.bf16.mxu0 0
    %1237 = vmatpush1.bf16.msra.mxu0 %v1191
    %1238 = vmatprep.subr.bf16.mxu0 0
    %1239 = vmatpush1.bf16.msra.mxu0 %v1192
    %1240 = vmatprep.subr.bf16.mxu0 0
    %1241 = vmatpush1.bf16.msra.mxu0 %v1193
    %1242 = vmatprep.subr.bf16.mxu0 0
    %1243 = vmatpush1.bf16.msra.mxu0 %v1194
    %1244 = vmatprep.subr.bf16.mxu0 0
    %1245 = vmatpush1.bf16.msra.mxu0 %v1195
    %1246 = vmatprep.subr.bf16.mxu0 0
    %1247 = vmatpush1.bf16.msra.mxu0 %v1196
    %1248 = vmatprep.subr.bf16.mxu0 0
    %1249 = vmatpush1.bf16.msra.mxu0 %v1197
    %1250 = vmatprep.subr.bf16.mxu0 0
    %1251 = vmatpush1.bf16.msra.mxu0 %v1198
    %1252 = vmatprep.subr.bf16.mxu0 0
    %1253 = vmatpush1.bf16.msra.mxu0 %v1199
    %1254 = vmatprep.subr.bf16.mxu0 0
    %1255 = vmatpush1.bf16.msra.mxu0 %v1200
    %1256 = vmatprep.subr.bf16.mxu0 0
    %1257 = vmatpush1.bf16.msra.mxu0 %v1201
    %1258 = vmatprep.subr.bf16.mxu0 0
    %1259 = vmatpush1.bf16.msra.mxu0 %v1202
    %1260 = vmatprep.subr.bf16.mxu0 0
    %1261 = vmatpush1.bf16.msra.mxu0 %v1203
    %1262 = vmatprep.subr.bf16.mxu0 0
    %1263 = vmatpush1.bf16.msra.mxu0 %v1204
    %1264 = vmatprep.subr.bf16.mxu0 0
    %1265 = vmatpush1.bf16.msra.mxu0 %v1205
    %1266 = vmatprep.mubr.bf16.mxu0 %v1067
    %1267 = vmatmul.mubr.bf16.gmra.mrb[0].mxu0 %v1066
    %v1268 = vpop.f32.mrb[0].mxu0
    %v1269 = vadd.f32 %v1112, %v1268
    %v1270 = vpop.f32.mrb[0].mxu0
    %v1271 = vpop.f32.mrb[0].mxu0
    %v1272 = vpop.f32.mrb[0].mxu0
    %1273 = vdwg.mxu0
    %1274 = vmatprep.subr.bf16.mxu0 0
    %1275 = vmatpush1.bf16.msra.mxu0 %v1206
    %1276 = vmatprep.subr.bf16.mxu0 0
    %1277 = vmatpush1.bf16.msra.mxu0 %v1207
    %1278 = vmatprep.subr.bf16.mxu0 0
    %1279 = vmatpush1.bf16.msra.mxu0 %v1232
    %1280 = vmatprep.subr.bf16.mxu0 0
    %1281 = vmatpush1.bf16.msra.mxu0 0
    %1282 = vmatprep.subr.bf16.mxu0 0
    %1283 = vmatpush1.bf16.msra.mxu0 0
    %1284 = vmatprep.subr.bf16.mxu0 0
    %1285 = vmatpush1.bf16.msra.mxu0 0
    %1286 = vmatprep.subr.bf16.mxu0 0
    %1287 = vmatpush1.bf16.msra.mxu0 0
    %1288 = vmatprep.subr.bf16.mxu0 0
    %1289 = vmatpush1.bf16.msra.mxu0 0
    %1290 = vmatprep.subr.bf16.mxu0 0
    %1291 = vmatpush1.bf16.msra.mxu0 0
    %1292 = vmatprep.subr.bf16.mxu0 0
    %1293 = vmatpush1.bf16.msra.mxu0 0
    %1294 = vmatprep.subr.bf16.mxu0 0
    %1295 = vmatpush1.bf16.msra.mxu0 0
    %1296 = vmatprep.subr.bf16.mxu0 0
    %1297 = vmatpush1.bf16.msra.mxu0 0
    %1298 = vmatprep.subr.bf16.mxu0 0
    %1299 = vmatpush1.bf16.msra.mxu0 0
    %1300 = vmatprep.subr.bf16.mxu0 0
    %1301 = vmatpush1.bf16.msra.mxu0 0
    %1302 = vmatprep.subr.bf16.mxu0 0
    %1303 = vmatpush1.bf16.msra.mxu0 0
    %1304 = vmatprep.subr.bf16.mxu0 0
    %1305 = vmatpush1.bf16.msra.mxu0 0
    %1306 = vmatprep.mubr.bf16.mxu0 0
    %1307 = vmatmul.mubr.bf16.gmra.mrb[0].mxu0 %v1228
    %v1308 = vpop.f32.mrb[0].mxu0
    %v1309 = vadd.f32 %v1269, %v1308
    %v1310 = vpop.f32.mrb[0].mxu0
    %v1311 = vpop.f32.mrb[0].mxu0
    %v1312 = vpop.f32.mrb[0].mxu0
    %1313 = vdwg.mxu0
    %v1314 = vtanh.pop %v1309
    %1315 = vst [vmem:[#allocation10] sm:$0xff] %v1314
    // Predicated region
    $region62: #{tpu_custom_call.1} parent=1 // pred_check
      _
    $region63: #{tpu_custom_call.1} parent=1 // pred_check_branch
      %1317 = sbr.rel (0) target = $region65
    $region64: #{tpu_custom_call.1} parent=1 // pred_region
      %s1319 = ssub.s32 128, 128
      %1320 = vsyncadd [#allocation4], %s1319
      %s1322 = sshll.u32 [#allocation10], 4
      %s1323 = int_to_ptr.vmem [resolvable:$true] %s1322
      %1325 = dma.vmem_to_hbm [thread:$0]  %s1323, 128, %s11, [#allocation4]
    $region65: #{tpu_custom_call.1} parent=1 // pred_fallthru
      _
    // Predicated region
    $region66: #{tpu_custom_call.1} parent=1 // pred_check
      _
    $region67: #{tpu_custom_call.1} parent=1 // pred_check_branch
      %1327 = sbr.rel (0) target = $region69
    $region68: #{tpu_custom_call.1} parent=1 // pred_region
      %1328 = dma.done [#allocation4], 128
    $region69: #{tpu_custom_call.1} parent=1 // pred_fallthru
      _
    %1329 = vsyncpa [#allocation3], 1
    %1330 = vsyncpa [#allocation6], 1
    %1331 = vsyncpa [#allocation9], 1
    %1332 = vsyncpa [#allocation4], 1

</llo_original>
